<compile_context>
chip_gen: v6e
topology: v6e:2x2x1
jax: 0.10.0
libtpu: 0.0.40
codegen_flags: <defaults>
</compile_context>

<pallas_src>
import functools

import jax
import jax.numpy as jnp
import numpy as np
from jax.experimental import pallas as pl
from jax.experimental.pallas import tpu as pltpu

COUT_PAD = 128                      # pad output channels to one full lane tile
TP_DEFAULT = 8                      # pooled output rows per grid step
# Scoped VMEM: we use only a few MiB; 32 MiB is safe on v7x (64 MiB physical)
# and leaves plenty of headroom on v5e/v6e (128 MiB physical).
VMEM_LIMIT = 32 * 1024 * 1024


def _round_up(a, b):
    return (a + b - 1) // b * b


def _fused_kernel(lhs_ref, w_ref, b_ref, o_ref, acc_ref, vs_ref, *,
                  Tp, Wlhs, Wsc, Pw):
    # ---- conv: one MXU dot over the full contraction (KH*KW*Cin) -----------
    # bf16 inputs, f32 accumulate, f32 bias add; result stays in VMEM scratch.
    acc_ref[...] = (
        jnp.dot(lhs_ref[...], w_ref[...], preferred_element_type=jnp.float32)
        + b_ref[...])

    # ---- fused 3x3 / stride-2 max pool on the in-VMEM accumulator ----------
    # vs holds the vertical (row) 3-tap max, one Wsc-wide slab per pooled row,
    # shifted by +8 scratch columns; columns never written stay -inf, which is
    # exactly the max-pool spatial padding semantics.
    vs_ref[...] = jnp.full(vs_ref.shape, -jnp.inf, dtype=jnp.float32)
    for p in range(Tp):                              # static unrolled loop
        r0 = acc_ref[pl.ds((2 * p) * Wlhs, Wlhs), :]
        r1 = acc_ref[pl.ds((2 * p + 1) * Wlhs, Wlhs), :]
        r2 = acc_ref[pl.ds((2 * p + 2) * Wlhs, Wlhs), :]
        vs_ref[pl.ds(p * Wsc + 8, Wlhs), :] = jnp.maximum(jnp.maximum(r0, r1), r2)

    # horizontal 3-tap max, stride 2: pooled col q uses conv cols
    # {2q-1, 2q, 2q+1} -> scratch cols {2q+7, 2q+8, 2q+9} (strided reads).
    for p in range(Tp):
        base = p * Wsc
        lt = vs_ref[pl.ds(base + 7, Pw, 2), :]
        ct = vs_ref[pl.ds(base + 8, Pw, 2), :]
        rt = vs_ref[pl.ds(base + 9, Pw, 2), :]
        o_ref[p] = jnp.maximum(jnp.maximum(lt, ct), rt)


def dirac_init_block(x_nchw, w_oihw, bias):
    """Conv2d(k=7, s=2, p=3, bias) -> MaxPool2d(k=3, s=2, p=1); NCHW in/out."""
    N, Cin, H, W = x_nchw.shape
    Cout = w_oihw.shape[0]
    assert Cout <= COUT_PAD, "Cout tiling not implemented (DiracNet uses 64)"
    KH = KW = 7
    S, P = 2, 3
    Hout = (H + 2 * P - KH) // S + 1
    Wout = (W + 2 * P - KW) // S + 1
    Ph = (Hout + 2 * 1 - 3) // 2 + 1          # pooled output height
    Pw = (Wout + 2 * 1 - 3) // 2 + 1          # pooled output width

    K = KH * KW * Cin                         # full im2col contraction
    Kpad = _round_up(K, 8)
    Wlhs = _round_up(Wout, 8)                 # sublane-aligned conv-row width
    Wsc = Wlhs + 8                            # pool scratch width (+8 shift)
    Tp = min(TP_DEFAULT, Ph)                  # pooled rows per band
    n_bands = (Ph + Tp - 1) // Tp
    BR = 2 * Tp + 1                           # conv rows per band (1-row halo)

    # ---- wrapper glue: full-K im2col (bf16) + band/halo layout --------------
    xh = jnp.transpose(x_nchw, (0, 2, 3, 1)).astype(jnp.bfloat16)     # NHWC
    xp = jnp.pad(xh, ((0, 0), (P, P), (P, P), (0, 0)))
    taps = [xp[:, kh:kh + S * Hout:S, kw:kw + S * Wout:S, :]
            for kh in range(KH) for kw in range(KW)]
    A = jnp.concatenate(taps, axis=-1)                 # (N, Hout, Wout, K)
    A = jnp.pad(A, ((0, 0), (0, 0), (0, 0), (0, Kpad - K)))
    if Wlhs > Wout:                                    # clamp-replicate edge cols
        A = jnp.pad(A, ((0, 0), (0, 0), (0, Wlhs - Wout), (0, 0)), mode="edge")

    # band t needs conv rows 2*t*Tp-1 .. 2*t*Tp+2*Tp-1; clamped indices are
    # max-equivalent to -inf padding (the clamped row is already in the window).
    rows = np.clip(
        2 * Tp * np.arange(n_bands)[:, None] - 1 + np.arange(BR)[None, :],
        0, Hout - 1)
    lhs = A[:, rows].reshape(N, n_bands, BR * Wlhs, Kpad)

    # weights: (Cout, Cin, KH, KW) -> (K(+pad), COUT_PAD) bf16; bias f32.
    w2 = jnp.transpose(w_oihw, (2, 3, 1, 0)).reshape(K, Cout)
    w2 = jnp.pad(w2, ((0, Kpad - K), (0, COUT_PAD - Cout))).astype(jnp.bfloat16)
    b2 = jnp.pad(bias.astype(jnp.float32), (0, COUT_PAD - Cout)).reshape(1, COUT_PAD)

    kernel = functools.partial(_fused_kernel, Tp=Tp, Wlhs=Wlhs, Wsc=Wsc, Pw=Pw)

    flops = 2 * N * n_bands * (BR * Wlhs) * Kpad * COUT_PAD
    bytes_accessed = (lhs.size * 2 + w2.size * 2 + b2.size * 4
                      + N * n_bands * Tp * Pw * COUT_PAD * 4)

    pooled = pl.pallas_call(
        kernel,
        out_shape=jax.ShapeDtypeStruct((N, n_bands * Tp, Pw, COUT_PAD),
                                       jnp.float32),
        grid=(N, n_bands),
        in_specs=[
            pl.BlockSpec((None, None, BR * Wlhs, Kpad), lambda n, t: (n, t, 0, 0)),
            pl.BlockSpec((Kpad, COUT_PAD), lambda n, t: (0, 0)),
            pl.BlockSpec((1, COUT_PAD), lambda n, t: (0, 0)),
        ],
        out_specs=pl.BlockSpec((None, Tp, Pw, COUT_PAD), lambda n, t: (n, t, 0, 0)),
        scratch_shapes=[
            pltpu.VMEM((BR * Wlhs, COUT_PAD), jnp.float32),   # conv accumulator
            pltpu.VMEM((Tp * Wsc, COUT_PAD), jnp.float32),    # row-max slabs
        ],
        compiler_params=pltpu.CompilerParams(
            dimension_semantics=("parallel", "parallel"),
            vmem_limit_bytes=VMEM_LIMIT),
        cost_estimate=pl.CostEstimate(flops=flops, transcendentals=0,
                                      bytes_accessed=bytes_accessed),
    )(lhs, w2, b2)

    out = pooled[:, :Ph, :, :Cout]                 # drop band/channel padding
    return jnp.transpose(out, (0, 3, 1, 2))        # NCHW


# ---------------------------------------------------------------------------
# Pure-JAX f32 reference (mirrors PyTorch semantics) for the correctness check
# ---------------------------------------------------------------------------
def reference(x, w, b):
    y = jax.lax.conv_general_dilated(
        x, w, window_strides=(2, 2), padding=((3, 3), (3, 3)),
        dimension_numbers=('NCHW', 'OIHW', 'NCHW'))
    y = y + b[None, :, None, None]
    y = jax.lax.reduce_window(
        y, -jnp.inf, jax.lax.max,
        window_dimensions=(1, 1, 3, 3),
        window_strides=(1, 1, 2, 2),
        padding=((0, 0), (0, 0), (1, 1), (1, 1)))
    return y


if __name__ == "__main__":
    key = jax.random.PRNGKey(0)
    kx, kw, kb = jax.random.split(key, 3)

    N, Cin, Cout, HW = 2, 3, 8, 16
    x = jax.random.normal(kx, (N, Cin, HW, HW), dtype=jnp.float32)
    w = jax.random.normal(kw, (Cout, Cin, 7, 7), dtype=jnp.float32) * 0.05
    b = jax.random.normal(kb, (Cout,), dtype=jnp.float32) * 0.1

    fwd = jax.jit(dirac_init_block)
    out = jax.block_until_ready(fwd(x, w, b))

    ref = jax.block_until_ready(reference(x, w, b))
    assert out.shape == ref.shape == (N, Cout, 4, 4), (out.shape, ref.shape)
    # bf16 MXU inputs with f32 accumulation -> compare to f32 ref at bf16 tolerance.
    np.testing.assert_allclose(np.asarray(out), np.asarray(ref),
                               rtol=2e-2, atol=3e-2)
    print("KERNEL_OK")
</pallas_src>

<mosaic_0001>
module attributes {stable_mosaic.version = 11 : i64} {
  func.func @_fused_kernel(%arg0: i32, %arg1: i32, %arg2: memref<1x1x72x152xbf16, #tpu.memory_space<vmem>>, %arg3: memref<152x128xbf16, #tpu.memory_space<vmem>>, %arg4: memref<1x128xf32, #tpu.memory_space<vmem>>, %arg5: memref<1x4x4x128xf32, #tpu.memory_space<vmem>>, %arg6: memref<72x128xf32, #tpu.memory_space<vmem>>, %arg7: memref<64x128xf32, #tpu.memory_space<vmem>>) attributes {dimension_semantics = [#tpu.dimension_semantics<parallel>, #tpu.dimension_semantics<parallel>], iteration_bounds = array<i64: 2, 1>, scalar_prefetch = 0 : i64, scratch_operands = 2 : i64, tpu.core_type = #tpu.core_type<tc>, window_params = [{transform_indices = @transform_0, window_bounds = array<i64: 1, 1, 72, 152>}, {pipeline_mode = #tpu.pipeline_mode<synchronous>, transform_indices = @transform_1, window_bounds = array<i64: 152, 128>}, {pipeline_mode = #tpu.pipeline_mode<synchronous>, transform_indices = @transform_2, window_bounds = array<i64: 1, 128>}, {transform_indices = @transform_3, window_bounds = array<i64: 1, 4, 4, 128>}]} {
    %c0 = arith.constant 0 : index
    %c0_0 = arith.constant 0 : index
    %c0_1 = arith.constant 0 : index
    %c0_2 = arith.constant 0 : index
    %0 = vector.load %arg2[%c0, %c0_0, %c0_1, %c0_2] : memref<1x1x72x152xbf16, #tpu.memory_space<vmem>>, vector<1x1x72x152xbf16>
    %1 = vector.shape_cast %0 : vector<1x1x72x152xbf16> to vector<72x152xbf16>
    %c0_3 = arith.constant 0 : index
    %c0_4 = arith.constant 0 : index
    %2 = vector.load %arg3[%c0_3, %c0_4] : memref<152x128xbf16, #tpu.memory_space<vmem>>, vector<152x128xbf16>
    %cst = arith.constant dense<0.000000e+00> : vector<72x128xf32>
    %3 = tpu.matmul %1, %2, %cst {dimension_numbers = #tpu.dot_dimension_numbers<[1], [0], [0], [1], [0, 0, 1, 1], [], []>} : vector<72x152xbf16>, vector<152x128xbf16>, vector<72x128xf32> -> vector<72x128xf32>
    %c0_5 = arith.constant 0 : index
    %c0_6 = arith.constant 0 : index
    %4 = vector.load %arg4[%c0_5, %c0_6] : memref<1x128xf32, #tpu.memory_space<vmem>>, vector<1x128xf32>
    %5 = vector.broadcast %4 : vector<1x128xf32> to vector<72x128xf32>
    %6 = arith.addf %3, %5 : vector<72x128xf32>
    %c0_7 = arith.constant 0 : index
    %c0_8 = arith.constant 0 : index
    %7 = vector.load %arg6[%c0_7, %c0_8] : memref<72x128xf32, #tpu.memory_space<vmem>>, vector<72x128xf32>
    tpu.vector_store %arg6[%c0_7, %c0_8], %6 {strides = array<i32>} : memref<72x128xf32, #tpu.memory_space<vmem>>, vector<72x128xf32>,
    %cst_9 = arith.constant 0xFF800000 : f32
    %8 = vector.broadcast %cst_9 : f32 to vector<64x128xf32>
    %c0_10 = arith.constant 0 : index
    %c0_11 = arith.constant 0 : index
    %9 = vector.load %arg7[%c0_10, %c0_11] : memref<64x128xf32, #tpu.memory_space<vmem>>, vector<64x128xf32>
    tpu.vector_store %arg7[%c0_10, %c0_11], %8 {strides = array<i32>} : memref<64x128xf32, #tpu.memory_space<vmem>>, vector<64x128xf32>,
    %c0_12 = arith.constant 0 : index
    %c0_13 = arith.constant 0 : index
    %10 = vector.load %arg6[%c0_12, %c0_13] : memref<72x128xf32, #tpu.memory_space<vmem>>, vector<8x128xf32>
    %c8 = arith.constant 8 : index
    %c0_14 = arith.constant 0 : index
    %11 = vector.load %arg6[%c8, %c0_14] : memref<72x128xf32, #tpu.memory_space<vmem>>, vector<8x128xf32>
    %c16 = arith.constant 16 : index
    %c0_15 = arith.constant 0 : index
    %12 = vector.load %arg6[%c16, %c0_15] : memref<72x128xf32, #tpu.memory_space<vmem>>, vector<8x128xf32>
    %13 = arith.maximumf %10, %11 : vector<8x128xf32>
    %14 = arith.maximumf %13, %12 : vector<8x128xf32>
    %c8_16 = arith.constant 8 : index
    %c0_17 = arith.constant 0 : index
    %15 = vector.load %arg7[%c8_16, %c0_17] : memref<64x128xf32, #tpu.memory_space<vmem>>, vector<8x128xf32>
    tpu.vector_store %arg7[%c8_16, %c0_17], %14 {strides = array<i32>} : memref<64x128xf32, #tpu.memory_space<vmem>>, vector<8x128xf32>,
    %c16_18 = arith.constant 16 : index
    %c0_19 = arith.constant 0 : index
    %16 = vector.load %arg6[%c16_18, %c0_19] : memref<72x128xf32, #tpu.memory_space<vmem>>, vector<8x128xf32>
    %c24 = arith.constant 24 : index
    %c0_20 = arith.constant 0 : index
    %17 = vector.load %arg6[%c24, %c0_20] : memref<72x128xf32, #tpu.memory_space<vmem>>, vector<8x128xf32>
    %c32 = arith.constant 32 : index
    %c0_21 = arith.constant 0 : index
    %18 = vector.load %arg6[%c32, %c0_21] : memref<72x128xf32, #tpu.memory_space<vmem>>, vector<8x128xf32>
    %19 = arith.maximumf %16, %17 : vector<8x128xf32>
    %20 = arith.maximumf %19, %18 : vector<8x128xf32>
    %c24_22 = arith.constant 24 : index
    %c0_23 = arith.constant 0 : index
    %21 = vector.load %arg7[%c24_22, %c0_23] : memref<64x128xf32, #tpu.memory_space<vmem>>, vector<8x128xf32>
    tpu.vector_store %arg7[%c24_22, %c0_23], %20 {strides = array<i32>} : memref<64x128xf32, #tpu.memory_space<vmem>>, vector<8x128xf32>,
    %c32_24 = arith.constant 32 : index
    %c0_25 = arith.constant 0 : index
    %22 = vector.load %arg6[%c32_24, %c0_25] : memref<72x128xf32, #tpu.memory_space<vmem>>, vector<8x128xf32>
    %c40 = arith.constant 40 : index
    %c0_26 = arith.constant 0 : index
    %23 = vector.load %arg6[%c40, %c0_26] : memref<72x128xf32, #tpu.memory_space<vmem>>, vector<8x128xf32>
    %c48 = arith.constant 48 : index
    %c0_27 = arith.constant 0 : index
    %24 = vector.load %arg6[%c48, %c0_27] : memref<72x128xf32, #tpu.memory_space<vmem>>, vector<8x128xf32>
    %25 = arith.maximumf %22, %23 : vector<8x128xf32>
    %26 = arith.maximumf %25, %24 : vector<8x128xf32>
    %c40_28 = arith.constant 40 : index
    %c0_29 = arith.constant 0 : index
    %27 = vector.load %arg7[%c40_28, %c0_29] : memref<64x128xf32, #tpu.memory_space<vmem>>, vector<8x128xf32>
    tpu.vector_store %arg7[%c40_28, %c0_29], %26 {strides = array<i32>} : memref<64x128xf32, #tpu.memory_space<vmem>>, vector<8x128xf32>,
    %c48_30 = arith.constant 48 : index
    %c0_31 = arith.constant 0 : index
    %28 = vector.load %arg6[%c48_30, %c0_31] : memref<72x128xf32, #tpu.memory_space<vmem>>, vector<8x128xf32>
    %c56 = arith.constant 56 : index
    %c0_32 = arith.constant 0 : index
    %29 = vector.load %arg6[%c56, %c0_32] : memref<72x128xf32, #tpu.memory_space<vmem>>, vector<8x128xf32>
    %c64 = arith.constant 64 : index
    %c0_33 = arith.constant 0 : index
    %30 = vector.load %arg6[%c64, %c0_33] : memref<72x128xf32, #tpu.memory_space<vmem>>, vector<8x128xf32>
    %31 = arith.maximumf %28, %29 : vector<8x128xf32>
    %32 = arith.maximumf %31, %30 : vector<8x128xf32>
    %c56_34 = arith.constant 56 : index
    %c0_35 = arith.constant 0 : index
    %33 = vector.load %arg7[%c56_34, %c0_35] : memref<64x128xf32, #tpu.memory_space<vmem>>, vector<8x128xf32>
    tpu.vector_store %arg7[%c56_34, %c0_35], %32 {strides = array<i32>} : memref<64x128xf32, #tpu.memory_space<vmem>>, vector<8x128xf32>,
    %c7 = arith.constant 7 : index
    %c0_36 = arith.constant 0 : index
    %34 = tpu.strided_load %arg7[%c7, %c0_36] {strides = array<i32: 2, 1>} : memref<64x128xf32, #tpu.memory_space<vmem>>, vector<4x128xf32>
    %c8_37 = arith.constant 8 : index
    %c0_38 = arith.constant 0 : index
    %35 = tpu.strided_load %arg7[%c8_37, %c0_38] {strides = array<i32: 2, 1>} : memref<64x128xf32, #tpu.memory_space<vmem>>, vector<4x128xf32>
    %c9 = arith.constant 9 : index
    %c0_39 = arith.constant 0 : index
    %36 = tpu.strided_load %arg7[%c9, %c0_39] {strides = array<i32: 2, 1>} : memref<64x128xf32, #tpu.memory_space<vmem>>, vector<4x128xf32>
    %37 = arith.maximumf %34, %35 : vector<4x128xf32>
    %38 = arith.maximumf %37, %36 : vector<4x128xf32>
    %c0_40 = arith.constant 0 : index
    %c0_41 = arith.constant 0 : index
    %c0_42 = arith.constant 0 : index
    %c0_43 = arith.constant 0 : index
    %39 = vector.load %arg5[%c0_40, %c0_41, %c0_42, %c0_43] : memref<1x4x4x128xf32, #tpu.memory_space<vmem>>, vector<1x1x4x128xf32>
    %40 = vector.shape_cast %39 : vector<1x1x4x128xf32> to vector<4x128xf32>
    %41 = vector.shape_cast %38 : vector<4x128xf32> to vector<1x1x4x128xf32>
    tpu.vector_store %arg5[%c0_40, %c0_41, %c0_42, %c0_43], %41 {strides = array<i32>} : memref<1x4x4x128xf32, #tpu.memory_space<vmem>>, vector<1x1x4x128xf32>,
    %c23 = arith.constant 23 : index
    %c0_44 = arith.constant 0 : index
    %42 = tpu.strided_load %arg7[%c23, %c0_44] {strides = array<i32: 2, 1>} : memref<64x128xf32, #tpu.memory_space<vmem>>, vector<4x128xf32>
    %c24_45 = arith.constant 24 : index
    %c0_46 = arith.constant 0 : index
    %43 = tpu.strided_load %arg7[%c24_45, %c0_46] {strides = array<i32: 2, 1>} : memref<64x128xf32, #tpu.memory_space<vmem>>, vector<4x128xf32>
    %c25 = arith.constant 25 : index
    %c0_47 = arith.constant 0 : index
    %44 = tpu.strided_load %arg7[%c25, %c0_47] {strides = array<i32: 2, 1>} : memref<64x128xf32, #tpu.memory_space<vmem>>, vector<4x128xf32>
    %45 = arith.maximumf %42, %43 : vector<4x128xf32>
    %46 = arith.maximumf %45, %44 : vector<4x128xf32>
    %c0_48 = arith.constant 0 : index
    %c1 = arith.constant 1 : index
    %c0_49 = arith.constant 0 : index
    %c0_50 = arith.constant 0 : index
    %47 = vector.load %arg5[%c0_48, %c1, %c0_49, %c0_50] : memref<1x4x4x128xf32, #tpu.memory_space<vmem>>, vector<1x1x4x128xf32>
    %48 = vector.shape_cast %47 : vector<1x1x4x128xf32> to vector<4x128xf32>
    %49 = vector.shape_cast %46 : vector<4x128xf32> to vector<1x1x4x128xf32>
    tpu.vector_store %arg5[%c0_48, %c1, %c0_49, %c0_50], %49 {strides = array<i32>} : memref<1x4x4x128xf32, #tpu.memory_space<vmem>>, vector<1x1x4x128xf32>,
    %c39 = arith.constant 39 : index
    %c0_51 = arith.constant 0 : index
    %50 = tpu.strided_load %arg7[%c39, %c0_51] {strides = array<i32: 2, 1>} : memref<64x128xf32, #tpu.memory_space<vmem>>, vector<4x128xf32>
    %c40_52 = arith.constant 40 : index
    %c0_53 = arith.constant 0 : index
    %51 = tpu.strided_load %arg7[%c40_52, %c0_53] {strides = array<i32: 2, 1>} : memref<64x128xf32, #tpu.memory_space<vmem>>, vector<4x128xf32>
    %c41 = arith.constant 41 : index
    %c0_54 = arith.constant 0 : index
    %52 = tpu.strided_load %arg7[%c41, %c0_54] {strides = array<i32: 2, 1>} : memref<64x128xf32, #tpu.memory_space<vmem>>, vector<4x128xf32>
    %53 = arith.maximumf %50, %51 : vector<4x128xf32>
    %54 = arith.maximumf %53, %52 : vector<4x128xf32>
    %c0_55 = arith.constant 0 : index
    %c2 = arith.constant 2 : index
    %c0_56 = arith.constant 0 : index
    %c0_57 = arith.constant 0 : index
    %55 = vector.load %arg5[%c0_55, %c2, %c0_56, %c0_57] : memref<1x4x4x128xf32, #tpu.memory_space<vmem>>, vector<1x1x4x128xf32>
    %56 = vector.shape_cast %55 : vector<1x1x4x128xf32> to vector<4x128xf32>
    %57 = vector.shape_cast %54 : vector<4x128xf32> to vector<1x1x4x128xf32>
    tpu.vector_store %arg5[%c0_55, %c2, %c0_56, %c0_57], %57 {strides = array<i32>} : memref<1x4x4x128xf32, #tpu.memory_space<vmem>>, vector<1x1x4x128xf32>,
    %c55 = arith.constant 55 : index
    %c0_58 = arith.constant 0 : index
    %58 = tpu.strided_load %arg7[%c55, %c0_58] {strides = array<i32: 2, 1>} : memref<64x128xf32, #tpu.memory_space<vmem>>, vector<4x128xf32>
    %c56_59 = arith.constant 56 : index
    %c0_60 = arith.constant 0 : index
    %59 = tpu.strided_load %arg7[%c56_59, %c0_60] {strides = array<i32: 2, 1>} : memref<64x128xf32, #tpu.memory_space<vmem>>, vector<4x128xf32>
    %c57 = arith.constant 57 : index
    %c0_61 = arith.constant 0 : index
    %60 = tpu.strided_load %arg7[%c57, %c0_61] {strides = array<i32: 2, 1>} : memref<64x128xf32, #tpu.memory_space<vmem>>, vector<4x128xf32>
    %61 = arith.maximumf %58, %59 : vector<4x128xf32>
    %62 = arith.maximumf %61, %60 : vector<4x128xf32>
    %c0_62 = arith.constant 0 : index
    %c3 = arith.constant 3 : index
    %c0_63 = arith.constant 0 : index
    %c0_64 = arith.constant 0 : index
    %63 = vector.load %arg5[%c0_62, %c3, %c0_63, %c0_64] : memref<1x4x4x128xf32, #tpu.memory_space<vmem>>, vector<1x1x4x128xf32>
    %64 = vector.shape_cast %63 : vector<1x1x4x128xf32> to vector<4x128xf32>
    %65 = vector.shape_cast %62 : vector<4x128xf32> to vector<1x1x4x128xf32>
    tpu.vector_store %arg5[%c0_62, %c3, %c0_63, %c0_64], %65 {strides = array<i32>} : memref<1x4x4x128xf32, #tpu.memory_space<vmem>>, vector<1x1x4x128xf32>,
    return
  }
  func.func @transform_0(%arg0: i32, %arg1: i32) -> (i32, i32, i32, i32) {
    %c0_i32 = arith.constant 0 : i32
    %c0_i32_0 = arith.constant 0 : i32
    %c0_i32_1 = arith.constant 0 : i32
    return %arg0, %arg1, %c0_i32, %c0_i32_0 : i32, i32, i32, i32
  }
  func.func @transform_1(%arg0: i32, %arg1: i32) -> (i32, i32) {
    %c0_i32 = arith.constant 0 : i32
    %c0_i32_0 = arith.constant 0 : i32
    %c0_i32_1 = arith.constant 0 : i32
    return %c0_i32, %c0_i32_0 : i32, i32
  }
  func.func @transform_2(%arg0: i32, %arg1: i32) -> (i32, i32) {
    %c0_i32 = arith.constant 0 : i32
    %c0_i32_0 = arith.constant 0 : i32
    %c0_i32_1 = arith.constant 0 : i32
    return %c0_i32, %c0_i32_0 : i32, i32
  }
  func.func @transform_3(%arg0: i32, %arg1: i32) -> (i32, i32, i32, i32) {
    %c0_i32 = arith.constant 0 : i32
    %c0_i32_0 = arith.constant 0 : i32
    %c0_i32_1 = arith.constant 0 : i32
    return %arg0, %arg1, %c0_i32, %c0_i32_0 : i32, i32, i32, i32
  }
}

</mosaic_0001>

<llo_original>
// kernel: dirac_init_block.1
$region0: #{dirac_init_block.1}
  #allocation0 [shape = 'u32[]', space=smem, size = 0x4, offset = 0x4, fixed_abs, tag = 'smem constant byte address 0x4 - core index']
  #allocation1 [shape = 'u32[144,128]{1,0:T(1,128)}', space=vmem, size = 0x12000, scoped, tag = 'internal scratch']
  #allocation2 [shape = 'f32[72,128]{1,0:T(8,128)}', space=vmem, size = 0x9000, scoped, tag = 'scratch operand']
  #allocation3 [shape = 'f32[64,128]{1,0:T(8,128)}', space=vmem, size = 0x8000, scoped, tag = 'scratch operand']
  %s0 = inlined_call_operand.vmem [shape: bf16[2,1,72,152], index: 0, kind: input, shape index: {}]
  %s1 = inlined_call_operand.vmem [shape: bf16[152,128], index: 1, kind: input, shape index: {}]
  %s2 = inlined_call_operand.vmem [shape: f32[1,128], index: 2, kind: input, shape index: {}]
  %s3 = inlined_call_operand.vmem [shape: f32[2,4,4,128], index: 3, kind: output, shape index: {}]
  %s4 = sld [smem:[#allocation0]]
  $region45: #{dirac_init_block.1} parent=0
    _
  %s6 = ssub.s32 1, %s4
  %s7 = scalar_select 0, %s6, %s4
  loop: start=0, step=1, limit=4
  $region2: #{dirac_init_block.1} parent=0 // loop_pre_header
    _
  $region3: #{dirac_init_block.1} parent=0 // loop_header
    %s9 = sphi 0, %s13
    %p10 = scmp.ge.s32.totalorder %s9, 4
    %s16 = sphi 0, %s28
    %s17 = sphi 0, %s24
    %s18 = sphi 0, %s16
    %s19 = sphi 0, %s17
    %s20 = sphi 0, %s18
    %s21 = sphi 0, %s19
    %s33 = sphi 0, %s35
    %s36 = sphi 0, %s33
    %s37 = sphi 0, %s36
    %s53 = sphi 0, %s37
    %s57 = sphi 0, %s57
    %s59 = sphi 0, %s57
    %s60 = sphi 0, %s59
    %s74 = sphi 0, %s60
    %s78 = sphi 0, %s78
    %s80 = sphi 0, %s78
    %s81 = sphi 0, %s80
    %s95 = sphi 0, %s81
    %s103 = sphi 0, %s105
    %s106 = sphi 0, %s103
    %s107 = sphi 0, %s106
    %s123 = sphi 0, %s107
  $region4: #{dirac_init_block.1} parent=0 // loop_header_branch
    %12 = sbr.rel (%p10) target = $region8
  $region5: #{dirac_init_block.1} parent=0 // loop_body
    %s14 = ssub.s32 %s9, 1
    %s15 = ssub.s32 %s9, 2
    %s22 = sadd.s32 1, %s17
    %p23 = scmp.ge.s32.totalorder %s22, 1
    %s24 = scalar_select %p23, 0, %s22
    %s25 = sadd.s32 1, %s16
    %s26 = scalar_select %p23, %s25, %s16
    %p27 = scmp.ge.s32.totalorder %s26, 2
    %s28 = scalar_select %p27, 0, %s26
    %s29 = ssub.s32 %s16, %s28
    %s30 = ssub.s32 %s17, %s24
    %s31 = sor.u32 %s29, %s30
    %p32 = scmp.eq.s32.totalorder %s31, 0
    %s34 = sadd.s32 %s33, 1
    %s35 = scalar_select %p32, %s33, %s34
    %p38 = pneg %p32
    %p39 = scmp.eq.s32.totalorder %s9, 1
    %p40 = por %p38, %p39
    %p41 = scmp.ne.s32.totalorder %s33, %s36
    %p42 = scmp.eq.s32.totalorder %s9, 0
    %p43 = por %p41, %p42
    %p44 = scmp.ne.s32.totalorder %s33, %s36
    %p45 = scmp.eq.s32.totalorder %s14, 1
    %p46 = por %p44, %p45
    %p47 = scmp.ne.s32.totalorder %s36, %s37
    %p48 = scmp.eq.s32.totalorder %s14, 0
    %p49 = por %p47, %p48
    %p50 = scmp.ne.s32.totalorder %s36, %s37
    %p51 = scmp.eq.s32.totalorder %s15, 1
    %p52 = por %p50, %p51
    %p54 = scmp.ne.s32.totalorder %s37, %s53
    %p55 = scmp.eq.s32.totalorder %s15, 0
    %p56 = por %p54, %p55
    %s58 = sadd.s32 %s57, 1
    %p61 = scmp.eq.s32.totalorder %s9, 1
    %p62 = scmp.ne.s32.totalorder %s57, %s59
    %p63 = scmp.eq.s32.totalorder %s9, 0
    %p64 = por %p62, %p63
    %p65 = scmp.ne.s32.totalorder %s57, %s59
    %p66 = scmp.eq.s32.totalorder %s14, 1
    %p67 = por %p65, %p66
    %p68 = scmp.ne.s32.totalorder %s59, %s60
    %p69 = scmp.eq.s32.totalorder %s14, 0
    %p70 = por %p68, %p69
    %p71 = scmp.ne.s32.totalorder %s59, %s60
    %p72 = scmp.eq.s32.totalorder %s15, 1
    %p73 = por %p71, %p72
    %p75 = scmp.ne.s32.totalorder %s60, %s74
    %p76 = scmp.eq.s32.totalorder %s15, 0
    %p77 = por %p75, %p76
    %s79 = sadd.s32 %s78, 1
    %p82 = scmp.eq.s32.totalorder %s9, 1
    %p83 = scmp.ne.s32.totalorder %s78, %s80
    %p84 = scmp.eq.s32.totalorder %s9, 0
    %p85 = por %p83, %p84
    %p86 = scmp.ne.s32.totalorder %s78, %s80
    %p87 = scmp.eq.s32.totalorder %s14, 1
    %p88 = por %p86, %p87
    %p89 = scmp.ne.s32.totalorder %s80, %s81
    %p90 = scmp.eq.s32.totalorder %s14, 0
    %p91 = por %p89, %p90
    %p92 = scmp.ne.s32.totalorder %s80, %s81
    %p93 = scmp.eq.s32.totalorder %s15, 1
    %p94 = por %p92, %p93
    %p96 = scmp.ne.s32.totalorder %s81, %s95
    %p97 = scmp.eq.s32.totalorder %s15, 0
    %p98 = por %p96, %p97
    %s99 = ssub.s32 %s16, %s28
    %s100 = ssub.s32 %s17, %s24
    %s101 = sor.u32 %s99, %s100
    %p102 = scmp.eq.s32.totalorder %s101, 0
    %s104 = sadd.s32 %s103, 1
    %s105 = scalar_select %p102, %s103, %s104
    %p108 = pneg %p102
    %p109 = scmp.eq.s32.totalorder %s9, 1
    %p110 = por %p108, %p109
    %p111 = scmp.ne.s32.totalorder %s103, %s106
    %p112 = scmp.eq.s32.totalorder %s9, 0
    %p113 = por %p111, %p112
    %p114 = scmp.ne.s32.totalorder %s103, %s106
    %p115 = scmp.eq.s32.totalorder %s14, 1
    %p116 = por %p114, %p115
    %p117 = scmp.ne.s32.totalorder %s106, %s107
    %p118 = scmp.eq.s32.totalorder %s14, 0
    %p119 = por %p117, %p118
    %p120 = scmp.ne.s32.totalorder %s106, %s107
    %p121 = scmp.eq.s32.totalorder %s15, 1
    %p122 = por %p120, %p121
    %p124 = scmp.ne.s32.totalorder %s107, %s123
    %p125 = scmp.eq.s32.totalorder %s15, 0
    %p126 = por %p124, %p125
    %p127 = scmp.le.s32.totalorder 1, %s9
    %p128 = scmp.lt.s32.totalorder %s9, 3
    %p129 = pnand %p127, %p128
    %p130 = pneg %p129
    // Predicated region
    $region9: #{dirac_init_block.1} parent=5 // pred_check
      _
    $region10: #{dirac_init_block.1} parent=5 // pred_check_branch
      %132 = sbr.rel (%p129) target = $region12
    $region11: #{dirac_init_block.1} parent=5 // pred_region
      %s133 = ssub.s32 %s9, 1
      // Predicated region
      $region13: #{dirac_init_block.1} parent=11 // pred_check
        %p134 = pneg %p70
      $region14: #{dirac_init_block.1} parent=11 // pred_check_branch
        %136 = sbr.rel (%p134) target = $region16
      $region15: #{dirac_init_block.1} parent=11 // pred_region
        _
      $region16: #{dirac_init_block.1} parent=11 // pred_fallthru
        _
      // Predicated region
      $region17: #{dirac_init_block.1} parent=11 // pred_check
        %p137 = pneg %p91
      $region18: #{dirac_init_block.1} parent=11 // pred_check_branch
        %139 = sbr.rel (%p137) target = $region20
      $region19: #{dirac_init_block.1} parent=11 // pred_region
        _
      $region20: #{dirac_init_block.1} parent=11 // pred_fallthru
        _
    $region12: #{dirac_init_block.1} parent=5 // pred_fallthru
      _
    %p140 = scmp.lt.s32.totalorder %s9, 2
    // Predicated region
    $region21: #{dirac_init_block.1} parent=5 // pred_check
      %p141 = pneg %p140
    $region22: #{dirac_init_block.1} parent=5 // pred_check_branch
      %143 = sbr.rel (%p141) target = $region24
    $region23: #{dirac_init_block.1} parent=5 // pred_region
      // Predicated region
      $region25: #{dirac_init_block.1} parent=23 // pred_check
        %p144 = pneg %p43
      $region26: #{dirac_init_block.1} parent=23 // pred_check_branch
        %146 = sbr.rel (%p144) target = $region28
      $region27: #{dirac_init_block.1} parent=23 // pred_region
        %p147 = scmp.lt.s32.totalorder %s16, 1
        %s148 = scalar_select %p147, %s16, 1
        %p149 = scmp.lt.s32.totalorder %s17, 0
        %s150 = scalar_select %p149, %s17, 0
        %s151 = smul.addr %s150, 18
        %s152 = smul.addr %s148, 18
        %s153 = sadd.s32 %s151, %s152
        %s154 = smul.addr %s153, 4
        %s155 = scalar_lea.vmem %s0, %s154
      $region28: #{dirac_init_block.1} parent=23 // pred_fallthru
        _
    $region24: #{dirac_init_block.1} parent=5 // pred_fallthru
      _
    %p156 = scmp.le.s32.totalorder 1, %s9
    %p157 = scmp.lt.s32.totalorder %s9, 3
    %p158 = pnand %p156, %p157
    %p159 = pneg %p158
    // Predicated region
    $region29: #{dirac_init_block.1} parent=5 // pred_check
      _
    $region30: #{dirac_init_block.1} parent=5 // pred_check_branch
      %161 = sbr.rel (%p158) target = $region32
    $region31: #{dirac_init_block.1} parent=5 // pred_region
      %s162 = ssub.s32 %s9, 1
      %p163 = scmp.lt.s32.totalorder %s18, 1
      %s164 = scalar_select %p163, %s18, 1
      %p165 = scmp.lt.s32.totalorder %s19, 0
      %s166 = scalar_select %p165, %s19, 0
      %s167 = smul.addr %s166, 18
      %s168 = smul.addr %s164, 18
      %s169 = sadd.s32 %s167, %s168
      %s170 = smul.addr %s169, 4
      %s171 = scalar_lea.vmem %s0, %s170
      %p172 = pneg %p49
      %p173 = pneg %p46
      %p174 = pneg %p70
      %p175 = pneg %p67
      %p176 = pneg %p91
      %p177 = pneg %p88
      %p178 = pneg %p119
      %p179 = pneg %p116
      %s180 = smul.u32 4, %s19
      %p181 = scmp.lt.s32.totalorder %s18, 1
      %s182 = scalar_select %p181, %s18, 1
      %p183 = scmp.lt.s32.totalorder %s180, 3
      %s184 = scalar_select %p183, %s180, 3
      %s185 = smul.addr %s182, 4
      %s186 = sadd.s32 %s184, %s185
      %s187 = smul.addr %s186, 4
      %s188 = scalar_lea.vmem %s3, %s187
      %p189 = scmp.lt.s32.totalorder %s18, 1
      %s190 = scalar_select %p189, %s18, 1
      %p191 = scmp.lt.s32.totalorder %s19, 0
      %s192 = scalar_select %p191, %s19, 0
      %s193 = smul.addr %s192, 18
      %s194 = smul.addr %s190, 18
      %s195 = sadd.s32 %s193, %s194
      %s196 = smul.addr %s195, 4
      %s197 = scalar_lea.vmem %s0, %s196
      %s198 = smul.u32 4, %s19
      %p199 = scmp.lt.s32.totalorder %s18, 1
      %s200 = scalar_select %p199, %s18, 1
      %p201 = scmp.lt.s32.totalorder %s198, 3
      %s202 = scalar_select %p201, %s198, 3
      %s203 = smul.addr %s200, 4
      %s204 = sadd.s32 %s202, %s203
      %s205 = smul.addr %s204, 4
      %s206 = scalar_lea.vmem %s3, %s205
      %s207 = smul.u32 4, %s19
      %v209 = vld [vmem:[%s197] sm:$0xff]
      %v210 = vld [vmem:[%s197 + $0x8] sm:$0xff]
      %v211 = vld [vmem:[%s197 + $0x10] sm:$0xff]
      %v212 = vld [vmem:[%s197 + $0x18] sm:$0xff]
      %v213 = vld [vmem:[%s197 + $0x20] sm:$0xff]
      %v214 = vld [vmem:[%s197 + $0x28] sm:$0xff]
      %v215 = vld [vmem:[%s197 + $0x30] sm:$0xff]
      %v216 = vld [vmem:[%s197 + $0x38] sm:$0xff]
      %v217 = vld [vmem:[%s197 + $0x40] sm:$0xff]
      %v218 = vld [vmem:[%s1] sm:$0xf]
      %v219 = vld [vmem:[%s1 + $0x4] sm:$0xf]
      %v220 = vld [vmem:[%s1 + $0x8] sm:$0xf]
      %v221 = vld [vmem:[%s1 + $0xc] sm:$0xf]
      %v222 = vld [vmem:[%s1 + $0x10] sm:$0xf]
      %v223 = vld [vmem:[%s1 + $0x14] sm:$0xf]
      %v224 = vld [vmem:[%s1 + $0x18] sm:$0xf]
      %v225 = vld [vmem:[%s1 + $0x1c] sm:$0xf]
      %v226 = vld [vmem:[%s1 + $0x20] sm:$0xf]
      %v227 = vld [vmem:[%s1 + $0x24] sm:$0xf]
      %v228 = vld [vmem:[%s1 + $0x28] sm:$0xf]
      %v229 = vld [vmem:[%s1 + $0x2c] sm:$0xf]
      %v230 = vld [vmem:[%s1 + $0x30] sm:$0xf]
      %v231 = vld [vmem:[%s1 + $0x34] sm:$0xf]
      %v232 = vld [vmem:[%s1 + $0x38] sm:$0xf]
      %v233 = vld [vmem:[%s1 + $0x3c] sm:$0xf]
      %v234 = vld [vmem:[%s1 + $0x40] sm:$0xf]
      %v235 = vld [vmem:[%s1 + $0x44] sm:$0xf]
      %v236 = vld [vmem:[%s1 + $0x48] sm:$0xf]
      %v237 = vld [vmem:[%s2] sm:$0x1]
      %v239 = vlaneseq
      %v240 = vshrl.u32 %v239, 7
      %v241 = vsub.s32 0, %v240
      %v242 = vrot.slane %v237, %v241
      %v253 = vunpack.c.l.b16 %v209
      %v254 = vunpack.c.h.b16 %v209
      %v255 = vunpack.c.l.b16 %v210
      %v256 = vunpack.c.h.b16 %v210
      %v257 = vunpack.c.l.b16 %v211
      %v258 = vunpack.c.h.b16 %v211
      %v259 = vunpack.c.l.b16 %v212
      %v260 = vunpack.c.h.b16 %v212
      %v261 = vunpack.c.l.b16 %v213
      %v262 = vunpack.c.h.b16 %v213
      %v263 = vunpack.c.l.b16 %v214
      %v264 = vunpack.c.h.b16 %v214
      %v265 = vunpack.c.l.b16 %v215
      %v266 = vunpack.c.h.b16 %v215
      %v267 = vunpack.c.l.b16 %v216
      %v268 = vunpack.c.h.b16 %v216
      %v269 = vunpack.c.l.b16 %v217
      %v270 = vunpack.c.h.b16 %v217
      %v271 = vpack.c.b16 %v255, %v253
      %v272 = vpack.c.b16 %v256, %v254
      %v273 = vpack.c.b16 %v259, %v257
      %v274 = vpack.c.b16 %v260, %v258
      %v275 = vpack.c.b16 %v263, %v261
      %v276 = vpack.c.b16 %v264, %v262
      %v277 = vpack.c.b16 %v267, %v265
      %v278 = vpack.c.b16 %v268, %v266
      %v279 = vpack.c.b16 %v269, %v269
      %v280 = vpack.c.b16 %v270, %v270
      %v305 = vunpack.c.l.b16 %v218
      %v306 = vunpack.c.l.b16 %v219
      %v307 = vunpack.c.l.b16 %v220
      %v308 = vunpack.c.l.b16 %v221
      %v309 = vunpack.c.l.b16 %v222
      %v310 = vunpack.c.l.b16 %v223
      %v311 = vunpack.c.l.b16 %v224
      %v312 = vunpack.c.l.b16 %v225
      %v313 = vunpack.c.l.b16 %v226
      %v314 = vunpack.c.l.b16 %v227
      %v315 = vunpack.c.l.b16 %v228
      %v316 = vunpack.c.l.b16 %v229
      %v317 = vunpack.c.l.b16 %v230
      %v318 = vunpack.c.l.b16 %v231
      %v319 = vunpack.c.l.b16 %v232
      %v320 = vunpack.c.l.b16 %v233
      %v321 = vunpack.c.l.b16 %v234
      %v322 = vunpack.c.l.b16 %v235
      %v323 = vunpack.c.l.b16 %v236
      %v324 = vpack.c.b16 %v306, %v305
      %v325 = vpack.c.b16 %v308, %v307
      %v326 = vpack.c.b16 %v310, %v309
      %v327 = vpack.c.b16 %v312, %v311
      %v328 = vpack.c.b16 %v314, %v313
      %v329 = vpack.c.b16 %v316, %v315
      %v330 = vpack.c.b16 %v318, %v317
      %v331 = vpack.c.b16 %v320, %v319
      %v332 = vpack.c.b16 %v322, %v321
      %v333 = vpack.c.b16 %v323, %v323
      %vm343 = vcmask 195584
      %v345 = vsel %vm343, %v272, 0
      %v348 = vsel %vm343, %v274, 0
      %v351 = vsel %vm343, %v276, 0
      %v354 = vsel %vm343, %v278, 0
      %v357 = vsel %vm343, %v280, 0
      %vm359 = vcmask 1043456
      %v361 = vsel %vm359, %v333, 0
      %363 = vmatprep.subr.bf16.mxu0 0
      %364 = vmatpush1.bf16.msra.mxu0 %v331
      %365 = vmatprep.subr.bf16.mxu0 0
      %366 = vmatpush1.bf16.msra.mxu0 %v330
      %367 = vmatprep.subr.bf16.mxu0 0
      %368 = vmatpush1.bf16.msra.mxu0 %v329
      %369 = vmatprep.subr.bf16.mxu0 0
      %370 = vmatpush1.bf16.msra.mxu0 %v328
      %371 = vmatprep.subr.bf16.mxu0 0
      %372 = vmatpush1.bf16.msra.mxu0 %v327
      %373 = vmatprep.subr.bf16.mxu0 0
      %374 = vmatpush1.bf16.msra.mxu0 %v326
      %375 = vmatprep.subr.bf16.mxu0 0
      %376 = vmatpush1.bf16.msra.mxu0 %v325
      %377 = vmatprep.subr.bf16.mxu0 0
      %378 = vmatpush1.bf16.msra.mxu0 %v324
      %379 = vmatprep.subr.bf16.mxu0 0
      %380 = vmatpush2.bf16.msra.mxu0 0
      %381 = vmatprep.subr.bf16.mxu0 0
      %382 = vmatpush2.bf16.msra.mxu0 0
      %383 = vmatprep.subr.bf16.mxu0 0
      %384 = vmatpush2.bf16.msra.mxu0 0
      %385 = vmatprep.subr.bf16.mxu0 0
      %386 = vmatpush2.bf16.msra.mxu0 0
      %387 = vmatprep.subr.bf16.mxu0 0
      %388 = vmatpush2.bf16.msra.mxu0 0
      %389 = vmatprep.subr.bf16.mxu0 0
      %390 = vmatpush2.bf16.msra.mxu0 0
      %391 = vmatprep.subr.bf16.mxu0 0
      %392 = vmatpush2.bf16.msra.mxu0 %v361
      %393 = vmatprep.subr.bf16.mxu0 0
      %394 = vmatpush2.bf16.msra.mxu0 %v332
      %395 = vmatprep.mubr.bf16.mxu0 %v345
      %396 = vmatmul.mubr.bf16.gmra.mxu0 %v271
      %v397 = vpop.f32.mrf.mxu0
      %v398 = vadd.f32 %v242, %v397
      %v399 = vpop.f32.mrf.mxu0
      %v400 = vpop.f32.mrf.mxu0
      %v401 = vadd.f32 %v242, %v400
      %v402 = vpop.f32.mrf.mxu0
      %403 = vmatprep.mubr.bf16.mxu0 %v348
      %404 = vmatmul.mubr.bf16.gmra.mxu0 %v273
      %v405 = vpop.f32.mrf.mxu0
      %v406 = vadd.f32 %v242, %v405
      %v407 = vpop.f32.mrf.mxu0
      %v408 = vpop.f32.mrf.mxu0
      %v409 = vadd.f32 %v242, %v408
      %v410 = vpop.f32.mrf.mxu0
      %411 = vmatprep.mubr.bf16.mxu0 %v351
      %412 = vmatmul.mubr.bf16.gmra.mxu0 %v275
      %v413 = vpop.f32.mrf.mxu0
      %v414 = vadd.f32 %v242, %v413
      %v415 = vpop.f32.mrf.mxu0
      %v416 = vpop.f32.mrf.mxu0
      %v417 = vadd.f32 %v242, %v416
      %v418 = vpop.f32.mrf.mxu0
      %419 = vmatprep.mubr.bf16.mxu0 %v354
      %420 = vmatmul.mubr.bf16.gmra.mxu0 %v277
      %v421 = vpop.f32.mrf.mxu0
      %v422 = vadd.f32 %v242, %v421
      %v423 = vpop.f32.mrf.mxu0
      %v424 = vpop.f32.mrf.mxu0
      %v425 = vadd.f32 %v242, %v424
      %v426 = vpop.f32.mrf.mxu0
      %427 = vmatprep.mubr.bf16.mxu0 %v357
      %428 = vmatmul.mubr.bf16.gmra.mxu0 %v279
      %v429 = vpop.f32.mrf.mxu0
      %v430 = vadd.f32 %v242, %v429
      %v431 = vpop.f32.mrf.mxu0
      %v432 = vpop.f32.mrf.mxu0
      %v433 = vpop.f32.mrf.mxu0
      %434 = vdwg.mxu0
      %435 = vst [vmem:[#allocation2] sm:$0xff] %v398
      %436 = vst [vmem:[#allocation2 + $0x8] sm:$0xff] %v401
      %437 = vst [vmem:[#allocation2 + $0x10] sm:$0xff] %v406
      %438 = vst [vmem:[#allocation2 + $0x18] sm:$0xff] %v409
      %439 = vst [vmem:[#allocation2 + $0x20] sm:$0xff] %v414
      %440 = vst [vmem:[#allocation2 + $0x28] sm:$0xff] %v417
      %441 = vst [vmem:[#allocation2 + $0x30] sm:$0xff] %v422
      %442 = vst [vmem:[#allocation2 + $0x38] sm:$0xff] %v425
      %443 = vst [vmem:[#allocation2 + $0x40] sm:$0xff] %v430
      %444 = vst [vmem:[#allocation3] sm:$0xff] -inf
      %445 = vst [vmem:[#allocation3 + $0x8] sm:$0xff] -inf
      %446 = vst [vmem:[#allocation3 + $0x10] sm:$0xff] -inf
      %447 = vst [vmem:[#allocation3 + $0x18] sm:$0xff] -inf
      %448 = vst [vmem:[#allocation3 + $0x20] sm:$0xff] -inf
      %449 = vst [vmem:[#allocation3 + $0x28] sm:$0xff] -inf
      %450 = vst [vmem:[#allocation3 + $0x30] sm:$0xff] -inf
      %451 = vst [vmem:[#allocation3 + $0x38] sm:$0xff] -inf
      %v452 = vld [vmem:[#allocation2] sm:$0xff]
      %v453 = vld [vmem:[#allocation2 + $0x8] sm:$0xff]
      %v454 = vld [vmem:[#allocation2 + $0x10] sm:$0xff]
      %v455 = vmax.f32 %v452, %v453
      %v456 = vmax.f32 %v455, %v454
      %457 = vst [vmem:[#allocation3 + $0x8] sm:$0xff] %v456
      %v458 = vld [vmem:[#allocation2 + $0x10] sm:$0xff]
      %v459 = vld [vmem:[#allocation2 + $0x18] sm:$0xff]
      %v460 = vld [vmem:[#allocation2 + $0x20] sm:$0xff]
      %v461 = vmax.f32 %v458, %v459
      %v462 = vmax.f32 %v461, %v460
      %463 = vst [vmem:[#allocation3 + $0x18] sm:$0xff] %v462
      %v464 = vld [vmem:[#allocation2 + $0x20] sm:$0xff]
      %v465 = vld [vmem:[#allocation2 + $0x28] sm:$0xff]
      %v466 = vld [vmem:[#allocation2 + $0x30] sm:$0xff]
      %v467 = vmax.f32 %v464, %v465
      %v468 = vmax.f32 %v467, %v466
      %469 = vst [vmem:[#allocation3 + $0x28] sm:$0xff] %v468
      %v470 = vld [vmem:[#allocation2 + $0x30] sm:$0xff]
      %v471 = vld [vmem:[#allocation2 + $0x38] sm:$0xff]
      %v472 = vld [vmem:[#allocation2 + $0x40] sm:$0xff]
      %v473 = vmax.f32 %v470, %v471
      %v474 = vmax.f32 %v473, %v472
      %475 = vst [vmem:[#allocation3 + $0x38] sm:$0xff] %v474
      %s476 = scalar_lea.vmem [#allocation3], 7
      %v477 = vld [vmem:[%s476] ss:$2 sm:$0xf]
      %s478 = scalar_lea.vmem [#allocation3], 8
      %v479 = vld [vmem:[%s478] ss:$2 sm:$0xf]
      %s480 = scalar_lea.vmem [#allocation3], 9
      %v481 = vld [vmem:[%s480] ss:$2 sm:$0xf]
      %v482 = vmax.f32 %v477, %v479
      %v483 = vmax.f32 %v482, %v481
      %484 = vst [vmem:[%s206] sm:$0xf] %v483
      %s485 = scalar_lea.vmem [#allocation3], 23
      %v486 = vld [vmem:[%s485] ss:$2 sm:$0xf]
      %s487 = scalar_lea.vmem [#allocation3], 24
      %v488 = vld [vmem:[%s487] ss:$2 sm:$0xf]
      %s489 = scalar_lea.vmem [#allocation3], 25
      %v490 = vld [vmem:[%s489] ss:$2 sm:$0xf]
      %v491 = vmax.f32 %v486, %v488
      %v492 = vmax.f32 %v491, %v490
      %s493 = scalar_lea.vmem %s206, 4
      %494 = vst [vmem:[%s493] sm:$0xf] %v492
      %s495 = scalar_lea.vmem [#allocation3], 39
      %v496 = vld [vmem:[%s495] ss:$2 sm:$0xf]
      %s497 = scalar_lea.vmem [#allocation3], 40
      %v498 = vld [vmem:[%s497] ss:$2 sm:$0xf]
      %s499 = scalar_lea.vmem [#allocation3], 41
      %v500 = vld [vmem:[%s499] ss:$2 sm:$0xf]
      %v501 = vmax.f32 %v496, %v498
      %v502 = vmax.f32 %v501, %v500
      %s503 = scalar_lea.vmem %s206, 8
      %504 = vst [vmem:[%s503] sm:$0xf] %v502
      %s505 = scalar_lea.vmem [#allocation3], 55
      %v506 = vld [vmem:[%s505] ss:$2 sm:$0xf]
      %s507 = scalar_lea.vmem [#allocation3], 56
      %v508 = vld [vmem:[%s507] ss:$2 sm:$0xf]
      %s509 = scalar_lea.vmem [#allocation3], 57
      %v510 = vld [vmem:[%s509] ss:$2 sm:$0xf]
      %v511 = vmax.f32 %v506, %v508
      %v512 = vmax.f32 %v511, %v510
      %s513 = scalar_lea.vmem %s206, 12
      %514 = vst [vmem:[%s513] sm:$0xf] %v512
      %s515 = smul.u32 4, %s19
      %p516 = scmp.lt.s32.totalorder %s18, 1
      %s517 = scalar_select %p516, %s18, 1
      %p518 = scmp.lt.s32.totalorder %s515, 3
      %s519 = scalar_select %p518, %s515, 3
      %s520 = smul.addr %s517, 4
      %s521 = sadd.s32 %s519, %s520
      %s522 = smul.addr %s521, 4
      %s523 = scalar_lea.vmem %s3, %s522
      // Predicated region
      $region33: #{dirac_init_block.1} parent=31 // pred_check
        %p524 = pneg %p116
      $region34: #{dirac_init_block.1} parent=31 // pred_check_branch
        %526 = sbr.rel (%p524) target = $region36
      $region35: #{dirac_init_block.1} parent=31 // pred_region
        %s527 = smul.u32 4, %s19
      $region36: #{dirac_init_block.1} parent=31 // pred_fallthru
        _
    $region32: #{dirac_init_block.1} parent=5 // pred_fallthru
      _
    %p528 = scmp.le.s32.totalorder 2, %s9
    // Predicated region
    $region37: #{dirac_init_block.1} parent=5 // pred_check
      %p529 = pneg %p528
    $region38: #{dirac_init_block.1} parent=5 // pred_check_branch
      %531 = sbr.rel (%p529) target = $region40
    $region39: #{dirac_init_block.1} parent=5 // pred_region
      %s532 = ssub.s32 %s9, 2
      // Predicated region
      $region41: #{dirac_init_block.1} parent=39 // pred_check
        %p533 = pneg %p122
      $region42: #{dirac_init_block.1} parent=39 // pred_check_branch
        %535 = sbr.rel (%p533) target = $region44
      $region43: #{dirac_init_block.1} parent=39 // pred_region
        %s536 = smul.u32 4, %s21
        %p537 = scmp.lt.s32.totalorder %s20, 1
        %s538 = scalar_select %p537, %s20, 1
        %p539 = scmp.lt.s32.totalorder %s536, 3
        %s540 = scalar_select %p539, %s536, 3
        %s541 = smul.addr %s538, 4
        %s542 = sadd.s32 %s540, %s541
        %s543 = smul.addr %s542, 4
        %s544 = scalar_lea.vmem %s3, %s543
      $region44: #{dirac_init_block.1} parent=39 // pred_fallthru
        _
    $region40: #{dirac_init_block.1} parent=5 // pred_fallthru
      _
  $region6: #{dirac_init_block.1} parent=0 // loop_footer
    %s13 = sadd.s32 1, %s9
  $region7: #{dirac_init_block.1} parent=0 // loop_footer_branch
    %8 = sbr.rel target = $region3
  $region8: #{dirac_init_block.1} parent=0 // loop_exit
    _

</llo_original>
